<compile_context>
chip_gen: v5e
topology: v5e:2x2
jax: 0.10.0
libtpu: 0.0.40
codegen_flags: <defaults>
</compile_context>

<pallas_src>
import functools
import math

import jax
import jax.numpy as jnp
from jax import lax
from jax.experimental import pallas as pl
from jax.experimental.pallas import tpu as pltpu


def _round_up(x, m):
    return (x + m - 1) // m * m


def _pow2_floor(x):
    p = 1
    while p * 2 <= x:
        p *= 2
    return p


# ---------------------------------------------------------------------------
# Path A: tiny vocab, <=16-bit table. One-hot (in table dtype) x LUT on the
# MXU; exact because 0/1 and the selected row are representable exactly and
# every other product is an exact zero.
# ---------------------------------------------------------------------------
def _embed_onehot_kernel(ids_ref, lut_ref, out_ref, *, scale):
    tb = out_ref.shape[0]
    n_token = lut_ref.shape[0]
    ids = ids_ref[...]                                          # (tb, 1) int32
    cols = lax.broadcasted_iota(jnp.int32, (tb, n_token), 1)    # (tb, n_token)
    onehot = (ids == cols).astype(lut_ref.dtype)                # exact 0/1 in bf16
    acc = jnp.dot(onehot, lut_ref[...], preferred_element_type=jnp.float32)
    out_ref[...] = (acc * scale).astype(out_ref.dtype)


# ---------------------------------------------------------------------------
# Path B: VMEM-resident LUT, exact row-copy gather (any dtype, incl. f32).
# ---------------------------------------------------------------------------
def _embed_rowcopy_kernel(ids_ref, lut_ref, out_ref, *, scale, tb):
    # ids_ref: (n_padded,) int32 in SMEM (scalar prefetch)
    # lut_ref: (n_token, d_model) whole table in VMEM (fetched once)
    # out_ref: (tb, d_model) output block
    base = pl.program_id(0) * tb

    @pl.loop(0, tb)
    def _(r):
        tok = ids_ref[base + r]
        row = lut_ref[pl.ds(tok, 1), :]                         # (1, d_model)
        out_ref[pl.ds(r, 1), :] = (
            row.astype(jnp.float32) * scale
        ).astype(out_ref.dtype)


# ---------------------------------------------------------------------------
# Path C: large vocab. LUT stays in HBM; rows are DMA'd straight into the
# output block with a deep ring of in-flight per-row copies.
# ---------------------------------------------------------------------------
def _embed_gather_kernel(ids_ref, lut_hbm, out_ref, sems, *, scale, tb, ring,
                         n_padded):
    # ids_ref: (n_padded,) int32 in SMEM (scalar prefetch)
    # lut_hbm: (n_token, d_model) raw HBM ref (memory_space=pl.ANY)
    # out_ref: (tb, d_model) output block (DMA destination, no VMEM scratch)
    # sems:    DMA semaphores, shape (ring,)
    base = pl.program_id(0) * tb

    def start_row(r, tok):
        pltpu.make_async_copy(
            lut_hbm.at[tok], out_ref.at[r], sems.at[r & (ring - 1)]
        ).start()

    # Prime the ring (ring <= tb by construction; static unroll).
    for r in range(ring):
        start_row(r, ids_ref[base + r])

    @pl.loop(0, tb)
    def _(r):
        # Read the next token id BEFORE the wait (.wait() breaks SMEM sst->sld
        # forwarding); clamp so the SMEM read stays in-bounds.
        nxt_tok = ids_ref[jnp.minimum(base + r + ring, n_padded - 1)]
        pltpu.make_async_copy(
            lut_hbm.at[0], out_ref.at[r], sems.at[r & (ring - 1)]
        ).wait()

        @pl.when(r + ring < tb)
        def _():
            start_row(r + ring, nxt_tok)

    # Single in-place scale pass over the (lane/sublane dense) output block.
    out_ref[...] = (out_ref[...].astype(jnp.float32) * scale).astype(out_ref.dtype)


def embeddings_forward(x, lut, *, block_tokens=512, onehot_max_vocab=256,
                       force_path=None):
    """Pallas TPU forward of PyTorch `Embeddings`: lut[x] * sqrt(d_model).

    x:   int32 [B, S] token ids (OOB ids clamped to stay in-bounds).
    lut: [n_token, d_model] embedding table.
    Returns [B, S, d_model] in lut.dtype.
    """
    B, S = x.shape
    n_token, d_model = lut.shape
    out_dtype = lut.dtype
    itemsize = jnp.dtype(lut.dtype).itemsize
    scale = float(math.sqrt(d_model))

    # TODO(synk): if d_model is not a multiple of 128, pad the table width at
    # weight-load time so output stores stay lane-dense (vst, not vst.msk).

    n_tok_total = B * S
    pack = max(8, 32 // max(itemsize, 1))     # sublane packing: 8 f32 / 16 bf16 / 32 i8
    tb = block_tokens if n_tok_total >= block_tokens else _round_up(n_tok_total, pack)
    tb = _round_up(tb, pack)
    n_padded = _round_up(n_tok_total, tb)
    n_blocks = n_padded // tb

    # Clamp ids (PyTorch would error on OOB; clamping keeps addressing safe)
    # and pad to whole blocks (padded slots gather row 0, sliced off at end).
    ids = jnp.clip(x.reshape(-1).astype(jnp.int32), 0, n_token - 1)
    ids = jnp.pad(ids, (0, n_padded - n_tok_total))

    # ----- generation-aware VMEM budget (128 MiB v5e/v6e, 64 MiB v7x).
    try:
        vmem_cap = int(pltpu.get_tpu_info().vmem_capacity_bytes)
    except Exception:
        vmem_cap = 64 * 1024 * 1024           # conservative fallback (v7x)
    resident_budget = int(vmem_cap * 0.70)

    lut_bytes = n_token * d_model * itemsize
    out_blk_bytes = tb * d_model * itemsize
    # TODO(synk): single-buffer the invariant LUT block (pipeline_mode=
    # pl.Buffered(1)) once validated; until then budget it double-buffered.
    est_common = 2 * lut_bytes + 2 * out_blk_bytes + (1 << 20)
    est_onehot = est_common + 2 * tb * 4 + tb * n_token * itemsize + tb * d_model * 4
    est_rowcopy = est_common + tb * d_model * 4

    narrow = itemsize <= 2
    if force_path is None:
        if narrow and n_token <= onehot_max_vocab and est_onehot <= resident_budget:
            path = "onehot"
        elif est_rowcopy <= resident_budget:
            path = "rowcopy"
        else:
            path = "gather"
    else:
        path = force_path

    # TODO(synk): on v7x, switch the token-block axis to pltpu.CORE_PARALLEL
    # (2 TensorCores/chip) once validated; "parallel" is kept for portability.
    dim_sem = ("parallel",)

    if path == "onehot":
        vmem_limit = min(int(est_onehot) + (2 << 20), int(vmem_cap * 0.85))
        grid_spec = pltpu.PrefetchScalarGridSpec(
            num_scalar_prefetch=0,
            grid=(n_blocks,),
            in_specs=[
                pl.BlockSpec((tb, 1), lambda i: (i, 0)),              # ids block
                pl.BlockSpec((n_token, d_model), lambda i: (0, 0)),   # whole LUT
            ],
            out_specs=pl.BlockSpec((tb, d_model), lambda i: (i, 0)),
        )
        out_flat = pl.pallas_call(
            functools.partial(_embed_onehot_kernel, scale=scale),
            out_shape=jax.ShapeDtypeStruct((n_padded, d_model), out_dtype),
            grid_spec=grid_spec,
            compiler_params=pltpu.CompilerParams(
                dimension_semantics=dim_sem, vmem_limit_bytes=vmem_limit),
        )(ids.reshape(n_padded, 1), lut)

    elif path == "rowcopy":
        vmem_limit = min(int(est_rowcopy) + (2 << 20), int(vmem_cap * 0.85))
        # TODO(synk): for very long sequences deliver ids per block (SMEM
        # BlockSpec) instead of scalar-prefetching the whole padded vector.
        grid_spec = pltpu.PrefetchScalarGridSpec(
            num_scalar_prefetch=1,                                    # ids -> SMEM
            grid=(n_blocks,),
            in_specs=[pl.BlockSpec((n_token, d_model), lambda i, ids_s: (0, 0))],
            out_specs=pl.BlockSpec((tb, d_model), lambda i, ids_s: (i, 0)),
        )
        out_flat = pl.pallas_call(
            functools.partial(_embed_rowcopy_kernel, scale=scale, tb=tb),
            out_shape=jax.ShapeDtypeStruct((n_padded, d_model), out_dtype),
            grid_spec=grid_spec,
            compiler_params=pltpu.CompilerParams(
                dimension_semantics=dim_sem, vmem_limit_bytes=vmem_limit),
        )(ids, lut)

    else:  # "gather"
        ring = _pow2_floor(min(64, tb))       # deep ring of in-flight row DMAs
        grid_spec = pltpu.PrefetchScalarGridSpec(
            num_scalar_prefetch=1,                                    # ids -> SMEM
            grid=(n_blocks,),
            in_specs=[pl.BlockSpec(memory_space=pl.ANY)],             # LUT in HBM
            out_specs=pl.BlockSpec((tb, d_model), lambda i, ids_s: (i, 0)),
            scratch_shapes=[pltpu.SemaphoreType.DMA((ring,))],
        )
        out_flat = pl.pallas_call(
            functools.partial(_embed_gather_kernel, scale=scale, tb=tb,
                              ring=ring, n_padded=n_padded),
            out_shape=jax.ShapeDtypeStruct((n_padded, d_model), out_dtype),
            grid_spec=grid_spec,
            compiler_params=pltpu.CompilerParams(dimension_semantics=dim_sem),
        )(ids, lut)

    return out_flat[:n_tok_total].reshape(B, S, d_model)


if __name__ == "__main__":
    # Small deterministic problem consistent with the module.
    n_token = 64
    d_model = 128
    batch, seq = 2, 8

    key = jax.random.PRNGKey(0)
    k_lut, k_ids = jax.random.split(key)

    lut_f32 = jax.random.normal(k_lut, (n_token, d_model), dtype=jnp.float32)
    x = jax.random.randint(k_ids, (batch, seq), 0, n_token, dtype=jnp.int32)
    scale = math.sqrt(d_model)

    # f32 table -> VMEM-resident row-copy path (exact, no MXU rounding).
    ref_f32 = lut_f32[x] * scale
    out_row = jax.block_until_ready(embeddings_forward(x, lut_f32))
    assert out_row.shape == (batch, seq, d_model)
    assert jnp.allclose(out_row, ref_f32, atol=1e-6, rtol=1e-6), "rowcopy mismatch"

    # bf16 table, tiny vocab -> one-hot MXU path (exact selection in bf16).
    lut_bf16 = lut_f32.astype(jnp.bfloat16)
    ref_bf16 = (lut_bf16[x].astype(jnp.float32) * scale).astype(jnp.bfloat16)
    out_oh = jax.block_until_ready(embeddings_forward(x, lut_bf16))
    assert jnp.allclose(out_oh.astype(jnp.float32), ref_bf16.astype(jnp.float32),
                        atol=2e-2, rtol=2e-2), "one-hot mismatch"

    # Large-vocab fallback (HBM row-gather DMA ring), forced on the same input.
    out_g = jax.block_until_ready(embeddings_forward(x, lut_f32, force_path="gather"))
    assert jnp.allclose(out_g, ref_f32, atol=1e-6, rtol=1e-6), "gather mismatch"

    print("KERNEL_OK")
</pallas_src>

<mosaic_0001>
module attributes {stable_mosaic.version = 11 : i64} {
  func.func @_embed_rowcopy_kernel(%arg0: i32, %arg1: memref<16xi32, #tpu.memory_space<smem>>, %arg2: memref<64x128xf32, #tpu.memory_space<vmem>>, %arg3: memref<16x128xf32, #tpu.memory_space<vmem>>) attributes {dimension_semantics = [#tpu.dimension_semantics<parallel>], iteration_bounds = array<i64: 1>, scalar_prefetch = 1 : i64, scratch_operands = 0 : i64, tpu.core_type = #tpu.core_type<tc>, window_params = [{pipeline_mode = #tpu.pipeline_mode<synchronous>, transform_indices = @transform_0, window_bounds = array<i64: 64, 128>}, {transform_indices = @transform_1, window_bounds = array<i64: 16, 128>}]} {
    %c16_i32 = arith.constant 16 : i32
    %0 = arith.muli %arg0, %c16_i32 : i32
    %c0_i32 = arith.constant 0 : i32
    %c16_i32_0 = arith.constant 16 : i32
    %1 = arith.addi %c0_i32, %c16_i32_0 : i32
    %c1_i32 = arith.constant 1 : i32
    scf.for %arg4 = %c0_i32 to %1 step %c1_i32  : i32 {
      %c1_i32_2 = arith.constant 1 : i32
      %2 = arith.muli %arg4, %c1_i32_2 : i32
      %c0_i32_3 = arith.constant 0 : i32
      %3 = arith.addi %c0_i32_3, %2 : i32
      %4 = arith.addi %0, %3 : i32
      %5 = arith.index_cast %4 : i32 to index
      %6 = memref.load %arg1[%5] : memref<16xi32, #tpu.memory_space<smem>>
      %7 = arith.index_cast %6 : i32 to index
      %c0 = arith.constant 0 : index
      %8 = vector.load %arg2[%7, %c0] : memref<64x128xf32, #tpu.memory_space<vmem>>, vector<1x128xf32>
      %cst = arith.constant 11.3137083 : f32
      %9 = vector.broadcast %cst : f32 to vector<1x128xf32>
      %10 = arith.mulf %8, %9 : vector<1x128xf32>
      %11 = arith.index_cast %3 : i32 to index
      %c0_4 = arith.constant 0 : index
      %12 = vector.load %arg3[%11, %c0_4] : memref<16x128xf32, #tpu.memory_space<vmem>>, vector<1x128xf32>
      tpu.vector_store %arg3[%11, %c0_4], %10 {strides = array<i32>} : memref<16x128xf32, #tpu.memory_space<vmem>>, vector<1x128xf32>,
    }
    %c16_i32_1 = arith.constant 16 : i32
    return
  }
  func.func @transform_0(%arg0: i32, %arg1: memref<16xi32, #tpu.memory_space<smem>>) -> (i32, i32) {
    %c0_i32 = arith.constant 0 : i32
    %c0_i32_0 = arith.constant 0 : i32
    %c0_i32_1 = arith.constant 0 : i32
    return %c0_i32, %c0_i32_0 : i32, i32
  }
  func.func @transform_1(%arg0: i32, %arg1: memref<16xi32, #tpu.memory_space<smem>>) -> (i32, i32) {
    %c0_i32 = arith.constant 0 : i32
    %c0_i32_0 = arith.constant 0 : i32
    return %arg0, %c0_i32 : i32, i32
  }
}

</mosaic_0001>

<llo_original>
// kernel: tpu_custom_call.1
$region0: #{tpu_custom_call.1}
  #allocation0 [shape = 'u32[]', space=smem, size = 0x4, offset = 0x4, fixed_abs, tag = 'smem constant byte address 0x4 - core index']
  #allocation1 [shape = 'u32[72,128]{1,0:T(1,128)}', space=vmem, size = 0x9000, scoped, tag = 'internal scratch']
  #allocation2 [shape = 's32[1]{0}', space=sflag, size = 0x4, scoped, tag = 'scoped memory for tpu_custom_call.1']
  #allocation3 [shape = 'u8[512]{0}', space=smem, size = 0x200, scoped, tag = 'prefetched SMEM operand 0']
  %s0 = inlined_call_operand.hbm [shape: s32[16], index: 0, kind: input, shape index: {}]
  %s1 = inlined_call_operand.hbm [shape: f32[64,128], index: 1, kind: input, shape index: {}]
  %s2 = inlined_call_operand.hbm [shape: f32[16,128], index: 2, kind: output, shape index: {}]
  %s3 = sld [smem:[#allocation0]]
  $region25: #{tpu_custom_call.1} parent=0
    _
  %s5 = ssub.s32 1, %s3
  %s6 = scalar_select 0, %s5, %s3
  %s8 = sshll.u32 %s0, 4
  %s9 = int_to_ptr.hbm [resolvable:$true] %s8
  %11 = dma.hbm_to_smem %s9, 16, [#allocation3], [#allocation2]
  %13 = dma.done [#allocation2], 16
  %14 = sfence
  $region1: #{tpu_custom_call.1} parent=0
    #allocation4 [shape = 'u8[32768]{0}', space=vmem, size = 0x8000, scoped, tag = 'input window, operand 1, single buffered']
    #allocation5 [shape = 's32[1]{0}', space=sflag, size = 0x4, scoped, tag = 'scoped memory for tpu_custom_call.1']
    #allocation6 [shape = 's32[1]{0}', space=sflag, size = 0x4, scoped, tag = 'scoped memory for tpu_custom_call.1']
    #allocation7 [shape = 'u8[8192]{0}', space=vmem, size = 0x2000, scoped, tag = 'output window, operand 0, single buffered']
    %15 = vsyncpa [#allocation5], 0
    %16 = vsyncpa [#allocation6], 0
    // Predicated region
    $region2: #{tpu_custom_call.1} parent=1 // pred_check
      _
    $region3: #{tpu_custom_call.1} parent=1 // pred_check_branch
      %18 = sbr.rel (0) target = $region5
    $region4: #{tpu_custom_call.1} parent=1 // pred_region
      %20 = vsyncadd [#allocation5], 0
      %s21 = sshll.u32 %s1, 4
      %s22 = int_to_ptr.hbm [resolvable:$true] %s21
      %s23 = sshll.u32 [#allocation4], 4
      %s24 = int_to_ptr.vmem [resolvable:$true] %s23
      %29 = dma.hbm_to_vmem [thread:$0]  %s22, 1024, %s24, [#allocation5], 128, 128, 8
    $region5: #{tpu_custom_call.1} parent=1 // pred_fallthru
      _
    // Predicated region
    $region6: #{tpu_custom_call.1} parent=1 // pred_check
      _
    $region7: #{tpu_custom_call.1} parent=1 // pred_check_branch
      %31 = sbr.rel (0) target = $region9
    $region8: #{tpu_custom_call.1} parent=1 // pred_region
      %33 = dma.done [#allocation5], 1024
    $region9: #{tpu_custom_call.1} parent=1 // pred_fallthru
      _
    %s34 = smul.u32 0, 16
    loop: start=0, step=1, limit=16
    $region10: #{tpu_custom_call.1} parent=1 // loop_pre_header
      _
    $region11: #{tpu_custom_call.1} parent=1 // loop_header
      %s36 = sphi 0, %s40
      %p37 = scmp.ge.s32.totalorder %s36, 16
    $region12: #{tpu_custom_call.1} parent=1 // loop_header_branch
      %39 = sbr.rel (%p37) target = $region16
    $region13: #{tpu_custom_call.1} parent=1 // loop_body
      %s41 = sadd.s32 %s34, %s36
      %s42 = sld [smem:[#allocation3 + %s41]]
      %s43 = scalar_lea.vmem [#allocation4], %s42
      %v44 = vld [vmem:[%s43] sm:$0x1]
      %v45 = vmul.f32 %v44, 11.313708
      %s46 = scalar_lea.vmem [#allocation7], %s36
      %47 = vst [vmem:[%s46] sm:$0x1] %v45
    $region14: #{tpu_custom_call.1} parent=1 // loop_footer
      %s40 = sadd.s32 1, %s36
    $region15: #{tpu_custom_call.1} parent=1 // loop_footer_branch
      %35 = sbr.rel target = $region11
    $region16: #{tpu_custom_call.1} parent=1 // loop_exit
      _
    // Predicated region
    $region17: #{tpu_custom_call.1} parent=1 // pred_check
      _
    $region18: #{tpu_custom_call.1} parent=1 // pred_check_branch
      %49 = sbr.rel (0) target = $region20
    $region19: #{tpu_custom_call.1} parent=1 // pred_region
      %51 = vsyncadd [#allocation6], 0
      %s52 = sshll.u32 [#allocation7], 4
      %s53 = int_to_ptr.vmem [resolvable:$true] %s52
      %s54 = sshll.u32 %s2, 4
      %s55 = int_to_ptr.hbm [resolvable:$true] %s54
      %60 = dma.vmem_to_hbm [thread:$0]  %s53, 256, %s55, [#allocation6], 128, 128, 8
    $region20: #{tpu_custom_call.1} parent=1 // pred_fallthru
      _
    // Predicated region
    $region21: #{tpu_custom_call.1} parent=1 // pred_check
      _
    $region22: #{tpu_custom_call.1} parent=1 // pred_check_branch
      %62 = sbr.rel (0) target = $region24
    $region23: #{tpu_custom_call.1} parent=1 // pred_region
      %64 = dma.done [#allocation6], 256
    $region24: #{tpu_custom_call.1} parent=1 // pred_fallthru
      _
    %65 = vsyncpa [#allocation5], 1
    %66 = vsyncpa [#allocation6], 1

</llo_original>
